<compile_context>
chip_gen: v5e
topology: v5e:2x2
jax: 0.10.0
libtpu: 0.0.40
codegen_flags: <defaults>
</compile_context>

<pallas_src>
import jax
import jax.numpy as jnp
from jax.experimental import pallas as pl
from jax.experimental.pallas import tpu as pltpu


def _conv1x1_hardsig_kernel(x_ref, w_ref, b_ref, o_ref):
    """Fused 1x1-conv + hardsigmoid over the interior pixels of one image.

    x_ref: (1, Cin,  M)  flattened pixels of one image (lane axis = pixels)
    w_ref: (Cout, Cin)   weights pre-scaled by 1/6
    b_ref: (Cout, 1)     bias pre-folded to (b + 3)/6
    o_ref: (1, Cout, M)
    """
    x = x_ref[0]                      # (Cin, M)
    w = w_ref[...]                    # (Cout, Cin)
    cin, m = x.shape
    cout = w.shape[0]

    acc = jnp.broadcast_to(b_ref[...], (cout, m)).astype(jnp.float32)
    # K = Cin is tiny (3): unrolled per-channel VPU FMAs, skip the MXU.
    for ci in range(cin):
        acc = acc + w[:, ci:ci + 1] * x[ci:ci + 1, :]

    o_ref[0] = jnp.clip(acc, 0.0, 1.0).astype(o_ref.dtype)


def conv1x1_pad1_hardsigmoid(x_nchw, weight, bias):
    """x_nchw: (N, Cin, H, W); weight: (Cout, Cin, 1, 1); bias: (Cout,).

    Returns NCHW output of shape (N, Cout, H+2, W+2), matching
    Conv2d(Cin, Cout, 1, stride=1, padding=1) followed by (v+3).clamp(0,6)/6.
    """
    N, Cin, H, W = x_nchw.shape
    Cout = weight.shape[0]
    Ho, Wo = H + 2, W + 2
    M = H * W

    # Fold the hardsigmoid affine into the (tiny) parameters at trace time.
    w_f = (weight.reshape(Cout, Cin) * (1.0 / 6.0)).astype(jnp.float32)
    b_f = ((bias + 3.0) * (1.0 / 6.0)).astype(jnp.float32)

    # NCHW is channel-major per image -> free reshape, no transpose.
    x_flat = x_nchw.reshape(N, Cin, M)

    # Whole image per grid step; (Cin + Cout) * M * 4 B stays far below VMEM
    # even at the module's 64x64 size.  Tile M only for very large images.
    interior = pl.pallas_call(
        _conv1x1_hardsig_kernel,
        out_shape=jax.ShapeDtypeStruct((N, Cout, M), x_nchw.dtype),
        grid_spec=pltpu.PrefetchScalarGridSpec(
            num_scalar_prefetch=0,
            grid=(N,),
            in_specs=[
                pl.BlockSpec((1, Cin, M), lambda n: (n, 0, 0)),
                pl.BlockSpec((Cout, Cin), lambda n: (0, 0)),
                pl.BlockSpec((Cout, 1), lambda n: (0, 0)),
            ],
            out_specs=pl.BlockSpec((1, Cout, M), lambda n: (n, 0, 0)),
        ),
        compiler_params=pltpu.CompilerParams(
            dimension_semantics=("parallel",)),
    )(x_flat, w_f, b_f.reshape(Cout, 1))

    # padding=1 with a 1x1 kernel: border pixels see zero input, so they equal
    # the per-channel constant hardsigmoid(bias) = clamp((b+3)/6, 0, 1).
    border = jnp.clip(b_f, 0.0, 1.0).astype(x_nchw.dtype)
    out = jnp.broadcast_to(border[None, :, None, None], (N, Cout, Ho, Wo))
    out = out.at[:, :, 1:H + 1, 1:W + 1].set(interior.reshape(N, Cout, H, W))
    return out


def reference(x_nchw, weight, bias):
    # Plain-JAX reference for correctness checking.
    N, Cin, H, W = x_nchw.shape
    Cout = weight.shape[0]
    x_pad = jnp.pad(x_nchw, ((0, 0), (0, 0), (1, 1), (1, 1)))
    x_nhwc = jnp.transpose(x_pad, (0, 2, 3, 1))
    w_mat = weight.reshape(Cout, Cin).T
    v1 = jnp.einsum("nhwc,cd->nhwd", x_nhwc, w_mat) + bias
    v2 = jnp.clip(v1 + 3.0, 0.0, 6.0) / 6.0
    return jnp.transpose(v2, (0, 3, 1, 2))


if __name__ == "__main__":
    key = jax.random.PRNGKey(0)
    kx, kw, kb = jax.random.split(key, 3)

    # Small shapes consistent with the module: N=1, Cin=3, H=W=16.
    x1 = jax.random.normal(kx, (1, 3, 16, 16), dtype=jnp.float32)

    # Deterministic parameters (Conv2d(3, 8, 1) -> weight (8,3,1,1), bias (8,))
    fan_in = 3 * 1 * 1
    bound = 1.0 / (fan_in ** 0.5)
    weight = jax.random.uniform(kw, (8, 3, 1, 1), jnp.float32, -bound, bound)
    bias = jax.random.uniform(kb, (8,), jnp.float32, -bound, bound)

    out = conv1x1_pad1_hardsigmoid(x1, weight, bias)
    out = jax.block_until_ready(out)

    ref = reference(x1, weight, bias)
    assert out.shape == (1, 8, 18, 18), out.shape
    assert jnp.allclose(out, ref, atol=1e-5, rtol=1e-5), float(
        jnp.max(jnp.abs(out - ref)))

    print("KERNEL_OK")
</pallas_src>

<mosaic_0001>
module attributes {stable_mosaic.version = 11 : i64} {
  func.func @_conv1x1_hardsig_kernel(%arg0: i32, %arg1: memref<1x3x256xf32, #tpu.memory_space<vmem>>, %arg2: memref<8x3xf32, #tpu.memory_space<vmem>>, %arg3: memref<8x1xf32, #tpu.memory_space<vmem>>, %arg4: memref<1x8x256xf32, #tpu.memory_space<vmem>>) attributes {dimension_semantics = [#tpu.dimension_semantics<parallel>], iteration_bounds = array<i64: 1>, scalar_prefetch = 0 : i64, scratch_operands = 0 : i64, tpu.core_type = #tpu.core_type<tc>, window_params = [{transform_indices = @transform_0, window_bounds = array<i64: 1, 3, 256>}, {pipeline_mode = #tpu.pipeline_mode<synchronous>, transform_indices = @transform_1, window_bounds = array<i64: 8, 3>}, {pipeline_mode = #tpu.pipeline_mode<synchronous>, transform_indices = @transform_2, window_bounds = array<i64: 8, 1>}, {transform_indices = @transform_3, window_bounds = array<i64: 1, 8, 256>}]} {
    %c0 = arith.constant 0 : index
    %c0_0 = arith.constant 0 : index
    %c0_1 = arith.constant 0 : index
    %0 = vector.load %arg1[%c0, %c0_0, %c0_1] : memref<1x3x256xf32, #tpu.memory_space<vmem>>, vector<1x3x256xf32>
    %1 = vector.shape_cast %0 : vector<1x3x256xf32> to vector<3x256xf32>
    %c0_2 = arith.constant 0 : index
    %c0_3 = arith.constant 0 : index
    %2 = vector.load %arg2[%c0_2, %c0_3] : memref<8x3xf32, #tpu.memory_space<vmem>>, vector<8x3xf32>
    %c0_4 = arith.constant 0 : index
    %c0_5 = arith.constant 0 : index
    %3 = vector.load %arg3[%c0_4, %c0_5] : memref<8x1xf32, #tpu.memory_space<vmem>>, vector<8x1xf32>
    %4 = vector.shape_cast %3 : vector<8x1xf32> to vector<8x1xf32>
    %5 = vector.broadcast %4 : vector<8x1xf32> to vector<8x256xf32>
    %6 = vector.extract_strided_slice %2 {offsets = [0, 0], sizes = [8, 1], strides = [1, 1]} : vector<8x3xf32> to vector<8x1xf32>
    %7 = vector.extract_strided_slice %1 {offsets = [0, 0], sizes = [1, 256], strides = [1, 1]} : vector<3x256xf32> to vector<1x256xf32>
    %8 = vector.broadcast %6 : vector<8x1xf32> to vector<8x256xf32>
    %9 = vector.broadcast %7 : vector<1x256xf32> to vector<8x256xf32>
    %10 = arith.mulf %8, %9 : vector<8x256xf32>
    %11 = arith.addf %5, %10 : vector<8x256xf32>
    %12 = vector.extract_strided_slice %2 {offsets = [0, 1], sizes = [8, 1], strides = [1, 1]} : vector<8x3xf32> to vector<8x1xf32>
    %13 = vector.extract_strided_slice %1 {offsets = [1, 0], sizes = [1, 256], strides = [1, 1]} : vector<3x256xf32> to vector<1x256xf32>
    %14 = vector.broadcast %12 : vector<8x1xf32> to vector<8x256xf32>
    %15 = vector.broadcast %13 : vector<1x256xf32> to vector<8x256xf32>
    %16 = arith.mulf %14, %15 : vector<8x256xf32>
    %17 = arith.addf %11, %16 : vector<8x256xf32>
    %18 = vector.extract_strided_slice %2 {offsets = [0, 2], sizes = [8, 1], strides = [1, 1]} : vector<8x3xf32> to vector<8x1xf32>
    %19 = vector.extract_strided_slice %1 {offsets = [2, 0], sizes = [1, 256], strides = [1, 1]} : vector<3x256xf32> to vector<1x256xf32>
    %20 = vector.broadcast %18 : vector<8x1xf32> to vector<8x256xf32>
    %21 = vector.broadcast %19 : vector<1x256xf32> to vector<8x256xf32>
    %22 = arith.mulf %20, %21 : vector<8x256xf32>
    %23 = arith.addf %17, %22 : vector<8x256xf32>
    %cst = arith.constant 0.000000e+00 : f32
    %cst_6 = arith.constant 1.000000e+00 : f32
    %24 = vector.broadcast %cst : f32 to vector<8x256xf32>
    %25 = arith.maximumf %24, %23 : vector<8x256xf32>
    %26 = vector.broadcast %cst_6 : f32 to vector<8x256xf32>
    %27 = arith.minimumf %26, %25 : vector<8x256xf32>
    %c0_7 = arith.constant 0 : index
    %c0_8 = arith.constant 0 : index
    %c0_9 = arith.constant 0 : index
    %28 = vector.load %arg4[%c0_7, %c0_8, %c0_9] : memref<1x8x256xf32, #tpu.memory_space<vmem>>, vector<1x8x256xf32>
    %29 = vector.shape_cast %28 : vector<1x8x256xf32> to vector<8x256xf32>
    %30 = vector.shape_cast %27 : vector<8x256xf32> to vector<1x8x256xf32>
    tpu.vector_store %arg4[%c0_7, %c0_8, %c0_9], %30 {strides = array<i32>} : memref<1x8x256xf32, #tpu.memory_space<vmem>>, vector<1x8x256xf32>,
    return
  }
  func.func @transform_0(%arg0: i32) -> (i32, i32, i32) {
    %c0_i32 = arith.constant 0 : i32
    %c0_i32_0 = arith.constant 0 : i32
    %c0_i32_1 = arith.constant 0 : i32
    return %arg0, %c0_i32, %c0_i32_0 : i32, i32, i32
  }
  func.func @transform_1(%arg0: i32) -> (i32, i32) {
    %c0_i32 = arith.constant 0 : i32
    %c0_i32_0 = arith.constant 0 : i32
    %c0_i32_1 = arith.constant 0 : i32
    return %c0_i32, %c0_i32_0 : i32, i32
  }
  func.func @transform_2(%arg0: i32) -> (i32, i32) {
    %c0_i32 = arith.constant 0 : i32
    %c0_i32_0 = arith.constant 0 : i32
    %c0_i32_1 = arith.constant 0 : i32
    return %c0_i32, %c0_i32_0 : i32, i32
  }
  func.func @transform_3(%arg0: i32) -> (i32, i32, i32) {
    %c0_i32 = arith.constant 0 : i32
    %c0_i32_0 = arith.constant 0 : i32
    %c0_i32_1 = arith.constant 0 : i32
    return %arg0, %c0_i32, %c0_i32_0 : i32, i32, i32
  }
}

</mosaic_0001>

<llo_original>
// kernel: tpu_custom_call.1
$region0: #{tpu_custom_call.1}
  #allocation0 [shape = 'u32[]', space=smem, size = 0x4, offset = 0x4, fixed_abs, tag = 'smem constant byte address 0x4 - core index']
  #allocation1 [shape = 'u32[72,128]{1,0:T(1,128)}', space=vmem, size = 0x9000, scoped, tag = 'internal scratch']
  %s0 = inlined_call_operand.vmem [shape: f32[1,3,256], index: 0, kind: input, shape index: {}]
  %s1 = inlined_call_operand.vmem [shape: f32[8,3], index: 1, kind: input, shape index: {}]
  %s2 = inlined_call_operand.vmem [shape: f32[8,1], index: 2, kind: input, shape index: {}]
  %s3 = inlined_call_operand.hbm [shape: f32[1,8,256], index: 3, kind: output, shape index: {}]
  %s4 = sld [smem:[#allocation0]]
  $region22: #{tpu_custom_call.1} parent=0
    _
  %s6 = ssub.s32 1, %s4
  %s7 = scalar_select 0, %s6, %s4
  $region1: #{tpu_custom_call.1} parent=0
    #allocation2 [shape = 'u8[8192]{0}', space=vmem, size = 0x2000, scoped, tag = 'output window, operand 0, single buffered']
    #allocation3 [shape = 's32[1]{0}', space=sflag, size = 0x4, scoped, tag = 'scoped memory for tpu_custom_call.1']
    %8 = vsyncpa [#allocation3], 0
    // Predicated region
    $region2: #{tpu_custom_call.1} parent=1 // pred_check
      _
    $region3: #{tpu_custom_call.1} parent=1 // pred_check_branch
      %10 = sbr.rel (0) target = $region5
    $region4: #{tpu_custom_call.1} parent=1 // pred_region
      _
    $region5: #{tpu_custom_call.1} parent=1 // pred_fallthru
      _
    // Predicated region
    $region6: #{tpu_custom_call.1} parent=1 // pred_check
      _
    $region7: #{tpu_custom_call.1} parent=1 // pred_check_branch
      %12 = sbr.rel (0) target = $region9
    $region8: #{tpu_custom_call.1} parent=1 // pred_region
      _
    $region9: #{tpu_custom_call.1} parent=1 // pred_fallthru
      _
    // Predicated region
    $region10: #{tpu_custom_call.1} parent=1 // pred_check
      _
    $region11: #{tpu_custom_call.1} parent=1 // pred_check_branch
      %14 = sbr.rel (0) target = $region13
    $region12: #{tpu_custom_call.1} parent=1 // pred_region
      _
    $region13: #{tpu_custom_call.1} parent=1 // pred_fallthru
      _
    %v15 = vld [vmem:[%s0] sm:$0x77]
    %v16 = vld [vmem:[%s1] sm:$0xff]
    %v17 = vld [vmem:[%s2] sm:$0xff]
    %19 = vset.pattern.permute.xlu0 0
    %20 = vperm.xlu0 %19, %v17
    %v21 = vpop.permute.xlu0 %20
    %24 = vset.pattern.permute.xlu0 0
    %25 = vperm.xlu0 %24, %v16
    %v26 = vpop.permute.xlu0 %25
    %v29 = vperm.slane %v15, 0
    %v30 = vperm.slane %v15, 4
    %v33 = vperm.slane %v29, 0
    %v34 = vperm.slane %v30, 0
    %v35 = vmul.f32 %v26, %v33
    %v36 = vmul.f32 %v26, %v34
    %v37 = vadd.f32 %v21, %v35
    %v38 = vadd.f32 %v21, %v36
    %39 = vset.pattern.permute.xlu0 1
    %40 = vperm.xlu0 %39, %v16
    %v41 = vpop.permute.xlu0 %40
    %v43 = vperm.slane %v15, 1
    %v44 = vperm.slane %v15, 5
    %v47 = vperm.slane %v43, 1
    %v48 = vperm.slane %v44, 1
    %v49 = vmul.f32 %v41, %v47
    %v50 = vmul.f32 %v41, %v48
    %v51 = vadd.f32 %v37, %v49
    %v52 = vadd.f32 %v38, %v50
    %53 = vset.pattern.permute.xlu0 2
    %54 = vperm.xlu0 %53, %v16
    %v55 = vpop.permute.xlu0 %54
    %v57 = vperm.slane %v15, 2
    %v58 = vperm.slane %v15, 6
    %v61 = vperm.slane %v57, 2
    %v62 = vperm.slane %v58, 2
    %v63 = vmul.f32 %v55, %v61
    %v64 = vmul.f32 %v55, %v62
    %v65 = vadd.f32 %v51, %v63
    %v66 = vadd.f32 %v52, %v64
    %v67 = vmax.f32 %v65, 0.0
    %v68 = vmax.f32 %v66, 0.0
    %v69 = vmin.f32 %v67, 1.0
    %v70 = vmin.f32 %v68, 1.0
    %71 = vst [vmem:[#allocation2] sm:$0xff] %v69
    %72 = vst [vmem:[#allocation2 + $0x8] sm:$0xff] %v70
    // Predicated region
    $region14: #{tpu_custom_call.1} parent=1 // pred_check
      _
    $region15: #{tpu_custom_call.1} parent=1 // pred_check_branch
      %74 = sbr.rel (0) target = $region17
    $region16: #{tpu_custom_call.1} parent=1 // pred_region
      %76 = vsyncadd [#allocation3], 0
      %s78 = sshll.u32 [#allocation2], 4
      %s79 = int_to_ptr.vmem [resolvable:$true] %s78
      %s80 = sshll.u32 %s3, 4
      %s81 = int_to_ptr.hbm [resolvable:$true] %s80
      %83 = dma.vmem_to_hbm [thread:$0]  %s79, 256, %s81, [#allocation3]
    $region17: #{tpu_custom_call.1} parent=1 // pred_fallthru
      _
    // Predicated region
    $region18: #{tpu_custom_call.1} parent=1 // pred_check
      _
    $region19: #{tpu_custom_call.1} parent=1 // pred_check_branch
      %85 = sbr.rel (0) target = $region21
    $region20: #{tpu_custom_call.1} parent=1 // pred_region
      %87 = dma.done [#allocation3], 256
    $region21: #{tpu_custom_call.1} parent=1 // pred_fallthru
      _
    %88 = vsyncpa [#allocation3], 1

</llo_original>
